<compile_context>
chip_gen: v7x
topology: tpu7x:2x2x1
jax: 0.10.0
libtpu: 0.0.40
codegen_flags: <defaults>
</compile_context>

<pallas_src>
import jax
import jax.numpy as jnp
from jax.experimental import pallas as pl
from jax.experimental.pallas import tpu as pltpu


# Total working-set budget (bytes, counted at f32) for ~2x double-buffered
# (in + out) tiles. Kept conservative so it fits v5e's 16 MiB default scoped
# VMEM and v7x's 64 MiB physical VMEM without any vmem_limit_bytes override.
_TOTAL_VMEM_BUDGET = 8 * 1024 * 1024
_MAX_ROW_TILE = 512
_MAX_COL_TILE = 4096  # multiple of 128


def _pick_row_tile(b, per_row_bytes):
    """Rows per tile so 2 (dbl-buf) x 2 (in+out) x TB x D stays under budget.

    Returns 0 if no legal single-pass row tile fits (use the two-pass path).
    """
    rows_fit = _TOTAL_VMEM_BUDGET // (4 * per_row_bytes)
    if b <= rows_fit and b <= _MAX_ROW_TILE:
        return b                          # full-batch block dim is always legal
    tb = min(rows_fit, _MAX_ROW_TILE, b)
    return (tb // 8) * 8                  # (8,128) sublane rule for partial blocks


def _l2norm_rows_kernel(x_ref, o_ref):
    # x_ref / o_ref: (TB, D) block resident in VMEM.
    x = x_ref[...].astype(jnp.float32)
    ss = jnp.sum(x * x, axis=1, keepdims=True)               # (TB, 1)
    # 1 / max(||x||, 1e-12) == rsqrt(max(||x||^2, 1e-24)); rsqrt runs on the EUP.
    inv = jax.lax.rsqrt(jnp.maximum(ss, jnp.float32(1e-24)))
    o_ref[...] = (x * inv).astype(o_ref.dtype)


def _l2_normalize_rows_single(x2, tb):
    """Single-pass path: one full-width row tile per grid step."""
    b, d = x2.shape
    itemsize = jnp.dtype(x2.dtype).itemsize
    return pl.pallas_call(
        _l2norm_rows_kernel,
        out_shape=jax.ShapeDtypeStruct((b, d), x2.dtype),
        grid=(pl.cdiv(b, tb),),
        in_specs=[pl.BlockSpec((tb, d), lambda i: (i, 0))],
        out_specs=pl.BlockSpec((tb, d), lambda i: (i, 0)),
        compiler_params=pltpu.CompilerParams(
            dimension_semantics=("parallel",)),
        cost_estimate=pl.CostEstimate(
            flops=3 * b * d,
            transcendentals=b,
            bytes_accessed=2 * b * d * itemsize),
    )(x2)


def _l2_normalize_rows_two_pass(x2, tb=None, td=None):
    """Two-pass path for rows too wide to live in VMEM as a single tile."""
    b, d = x2.shape
    itemsize = jnp.dtype(x2.dtype).itemsize

    if td is None:
        td = d if d <= _MAX_COL_TILE else _MAX_COL_TILE
    if tb is None:
        rows_fit = max(1, _TOTAL_VMEM_BUDGET // (16 * td))
        if b <= rows_fit and b <= _MAX_ROW_TILE:
            tb = b
        else:
            tb = max(8, (min(rows_fit, _MAX_ROW_TILE, b) // 8) * 8)

    nb = pl.cdiv(b, tb)
    nd = pl.cdiv(d, td)

    # Pass 1: per-row sum of squares, accumulated across the D grid axis.
    def sumsq_kernel(x_ref, ss_ref):
        k = pl.program_id(1)

        @pl.when(k == 0)
        def _():
            ss_ref[...] = jnp.zeros_like(ss_ref)

        x = x_ref[...].astype(jnp.float32)
        # Mask padded lanes of a partial last D tile (padding is unspecified).
        col = k * td + jax.lax.broadcasted_iota(jnp.int32, x.shape, 1)
        x = jnp.where(col < d, x, jnp.float32(0.0))
        ss_ref[...] += jnp.sum(x * x, axis=1, keepdims=True)

    ss = pl.pallas_call(
        sumsq_kernel,
        out_shape=jax.ShapeDtypeStruct((b, 1), jnp.float32),
        grid=(nb, nd),
        in_specs=[pl.BlockSpec((tb, td), lambda i, k: (i, k))],
        out_specs=pl.BlockSpec((tb, 1), lambda i, k: (i, 0)),
        compiler_params=pltpu.CompilerParams(
            dimension_semantics=("parallel", "arbitrary")),
        cost_estimate=pl.CostEstimate(
            flops=2 * b * d,
            transcendentals=0,
            bytes_accessed=b * d * itemsize + b * 4),
    )(x2)

    # Pass 2: scale each D tile by the precomputed inverse norm.
    def scale_kernel(x_ref, ss_ref, o_ref):
        inv = jax.lax.rsqrt(jnp.maximum(ss_ref[...], jnp.float32(1e-24)))
        o_ref[...] = (x_ref[...].astype(jnp.float32) * inv).astype(o_ref.dtype)

    return pl.pallas_call(
        scale_kernel,
        out_shape=jax.ShapeDtypeStruct((b, d), x2.dtype),
        grid=(nb, nd),
        in_specs=[pl.BlockSpec((tb, td), lambda i, k: (i, k)),
                  pl.BlockSpec((tb, 1), lambda i, k: (i, 0))],
        out_specs=pl.BlockSpec((tb, td), lambda i, k: (i, k)),
        compiler_params=pltpu.CompilerParams(
            dimension_semantics=("parallel", "parallel")),
        cost_estimate=pl.CostEstimate(
            flops=b * d,
            transcendentals=b,
            bytes_accessed=2 * b * d * itemsize + b * 4),
    )(x2, ss)


def pattern_norm(x, scale=1.0, *, min_pallas_bytes=0):
    """JAX/Pallas equivalent of the PyTorch pattern_norm module.

    `min_pallas_bytes`: if the tensor is smaller than this, use a plain-JAX
    expression (launch/pipeline overhead dominates at tiny sizes). Default 0
    always uses the Pallas kernel.
    """
    del scale  # unused in the PyTorch forward pass
    sizes = x.shape
    if len(sizes) <= 2:
        return x

    b = sizes[0]
    d = 1
    for s in sizes[1:]:
        d *= s
    x2 = x.reshape(b, d)

    if x2.size * jnp.dtype(x2.dtype).itemsize < min_pallas_bytes:
        # Tiny-tensor fast path: let XLA fuse it.
        xf = x2.astype(jnp.float32)
        norm = jnp.maximum(
            jnp.sqrt(jnp.sum(xf * xf, axis=1, keepdims=True)), 1e-12)
        return (xf / norm).astype(x.dtype).reshape(sizes)

    tb = _pick_row_tile(b, d * 4)  # budget in f32 working precision
    if tb > 0:
        out = _l2_normalize_rows_single(x2, tb)
    else:
        out = _l2_normalize_rows_two_pass(x2)
    return out.reshape(sizes)


if __name__ == "__main__":
    key = jax.random.PRNGKey(0)
    # Small NCHW input consistent with a conv feature map.
    x = jax.random.normal(key, (2, 4, 16, 16), dtype=jnp.float32)

    y = jax.block_until_ready(pattern_norm(x))

    # Reference check in plain JAX (same math as torch F.normalize).
    xf = x.reshape(2, -1)
    norms = jnp.maximum(jnp.sqrt(jnp.sum(xf * xf, axis=1, keepdims=True)), 1e-12)
    ref = (xf / norms).reshape(x.shape)
    assert jnp.allclose(y, ref, atol=1e-6, rtol=1e-6), "mismatch vs reference (single-pass)"

    # Exercise the large-D two-pass path with small override tiles
    # (multi-tile D sweep with a partial last tile + partial batch tiles).
    xb = jax.random.normal(jax.random.PRNGKey(1), (16, 1000), dtype=jnp.float32)
    yb = jax.block_until_ready(_l2_normalize_rows_two_pass(xb, tb=8, td=256))
    nb_ = jnp.maximum(jnp.sqrt(jnp.sum(xb * xb, axis=1, keepdims=True)), 1e-12)
    assert jnp.allclose(yb, xb / nb_, atol=1e-6, rtol=1e-6), "mismatch vs reference (two-pass)"

    # 2-D input path is identity (no kernel needed).
    x2d = jax.random.normal(jax.random.PRNGKey(2), (2, 32), dtype=jnp.float32)
    y2d = jax.block_until_ready(pattern_norm(x2d))
    assert jnp.array_equal(y2d, x2d)

    print("KERNEL_OK")
</pallas_src>

<mosaic_0001>
module attributes {stable_mosaic.version = 11 : i64} {
  func.func @_l2norm_rows_kernel(%arg0: i32, %arg1: memref<2x1024xf32, #tpu.memory_space<vmem>>, %arg2: memref<2x1024xf32, #tpu.memory_space<vmem>>) attributes {dimension_semantics = [#tpu.dimension_semantics<parallel>], iteration_bounds = array<i64: 1>, scalar_prefetch = 0 : i64, scratch_operands = 0 : i64, tpu.core_type = #tpu.core_type<tc>, window_params = [{transform_indices = @transform_0, window_bounds = array<i64: 2, 1024>}, {transform_indices = @transform_1, window_bounds = array<i64: 2, 1024>}]} {
    %c0 = arith.constant 0 : index
    %c0_0 = arith.constant 0 : index
    %0 = vector.load %arg1[%c0, %c0_0] : memref<2x1024xf32, #tpu.memory_space<vmem>>, vector<2x1024xf32>
    %1 = arith.mulf %0, %0 : vector<2x1024xf32>
    %cst = arith.constant dense<0.000000e+00> : vector<2xf32>
    %2 = vector.multi_reduction <add>, %1, %cst [1] : vector<2x1024xf32> to vector<2xf32>
    %3 = vector.shape_cast %2 : vector<2xf32> to vector<2x1xf32>
    %cst_1 = arith.constant 1.000000e-24 : f32
    %4 = vector.broadcast %cst_1 : f32 to vector<2x1xf32>
    %5 = arith.maximumf %3, %4 : vector<2x1xf32>
    %6 = math.rsqrt %5 : vector<2x1xf32>
    %7 = vector.broadcast %6 : vector<2x1xf32> to vector<2x1024xf32>
    %8 = arith.mulf %0, %7 : vector<2x1024xf32>
    %c0_2 = arith.constant 0 : index
    %c0_3 = arith.constant 0 : index
    %9 = vector.load %arg2[%c0_2, %c0_3] : memref<2x1024xf32, #tpu.memory_space<vmem>>, vector<2x1024xf32>
    tpu.vector_store %arg2[%c0_2, %c0_3], %8 {strides = array<i32>} : memref<2x1024xf32, #tpu.memory_space<vmem>>, vector<2x1024xf32>,
    return
  }
  func.func @transform_0(%arg0: i32) -> (i32, i32) {
    %c0_i32 = arith.constant 0 : i32
    %c0_i32_0 = arith.constant 0 : i32
    return %arg0, %c0_i32 : i32, i32
  }
  func.func @transform_1(%arg0: i32) -> (i32, i32) {
    %c0_i32 = arith.constant 0 : i32
    %c0_i32_0 = arith.constant 0 : i32
    return %arg0, %c0_i32 : i32, i32
  }
}

</mosaic_0001>

<llo_original>
// kernel: tpu_custom_call.1
$region0: #{tpu_custom_call.1}
  #allocation0 [shape = 'u32[]', space=smem, size = 0x4, offset = 0x4, fixed_abs, tag = 'smem constant byte address 0x4 - core index']
  #allocation1 [shape = 'u32[144,128]{1,0:T(1,128)}', space=vmem, size = 0x12000, scoped, tag = 'internal scratch']
  %s0 = inlined_call_operand.hbm [shape: f32[2,1024], index: 0, kind: input, shape index: {}]
  %s1 = inlined_call_operand.hbm [shape: f32[2,1024], index: 1, kind: output, shape index: {}]
  %s2 = sld [smem:[#allocation0]]
  $region18: #{tpu_custom_call.1} parent=0
    _
  %s4 = ssub.s32 1, %s2
  %s5 = scalar_select 0, %s4, %s2
  $region1: #{tpu_custom_call.1} parent=0
    #allocation2 [shape = 'u8[8192]{0}', space=vmem, size = 0x2000, scoped, tag = 'input window, operand 0, single buffered']
    #allocation3 [shape = 's32[1]{0}', space=sflag, size = 0x4, scoped, tag = 'scoped memory for tpu_custom_call.1']
    #allocation4 [shape = 's32[1]{0}', space=sflag, size = 0x4, scoped, tag = 'scoped memory for tpu_custom_call.1']
    #allocation5 [shape = 'u8[8192]{0}', space=vmem, size = 0x2000, scoped, tag = 'output window, operand 0, single buffered']
    %6 = vsyncpa [#allocation3], 0
    %7 = vsyncpa [#allocation4], 0
    // Predicated region
    $region2: #{tpu_custom_call.1} parent=1 // pred_check
      _
    $region3: #{tpu_custom_call.1} parent=1 // pred_check_branch
      %9 = sbr.rel (0) target = $region5
    $region4: #{tpu_custom_call.1} parent=1 // pred_region
      %s11 = ssub.s32 256, 256
      %12 = vsyncadd [#allocation3], %s11
      %s14 = sshll.u32 [#allocation2], 4
      %s15 = int_to_ptr.vmem [resolvable:$true] %s14
      %17 = dma.hbm_to_vmem [thread:$0]  %s0, 256, %s15, [#allocation3]
    $region5: #{tpu_custom_call.1} parent=1 // pred_fallthru
      _
    // Predicated region
    $region6: #{tpu_custom_call.1} parent=1 // pred_check
      _
    $region7: #{tpu_custom_call.1} parent=1 // pred_check_branch
      %19 = sbr.rel (0) target = $region9
    $region8: #{tpu_custom_call.1} parent=1 // pred_region
      %20 = dma.done [#allocation3], 256
    $region9: #{tpu_custom_call.1} parent=1 // pred_fallthru
      _
    %v21 = vld [vmem:[#allocation2] sm:$0xff]
    %v22 = vld [vmem:[#allocation2 + $0x8] sm:$0xff]
    %v23 = vmul.f32 %v21, %v21
    %v24 = vmul.f32 %v22, %v22
    %v27 = vcombine.high %v23, %v23
    %v29 = vunpack.c.l.s4 1983009808
    %v30 = vunpack.c.0.s8 %v29
    %v31 = vlaneseq
    %v32 = vshrl.u32 %v31, 7
    %v33 = vsub.s32 %v30, %v32
    %v34 = vrot.slane %v23, %v33
    %v36 = vunpack.c.l.s4 1983009808
    %v37 = vunpack.c.0.s8 %v36
    %v38 = vlaneseq
    %v39 = vshrl.u32 %v38, 7
    %v40 = vsub.s32 %v37, %v39
    %v41 = vrot.slane %v27, %v40
    %v42 = vcombine.high %v34, %v34
    %v43 = vcombine.high %v41, %v41
    %v44 = vcombine.high %v24, %v24
    %v46 = vunpack.c.l.s4 1983009808
    %v47 = vunpack.c.0.s8 %v46
    %v48 = vlaneseq
    %v49 = vshrl.u32 %v48, 7
    %v50 = vsub.s32 %v47, %v49
    %v51 = vrot.slane %v24, %v50
    %v53 = vunpack.c.l.s4 1983009808
    %v54 = vunpack.c.0.s8 %v53
    %v55 = vlaneseq
    %v56 = vshrl.u32 %v55, 7
    %v57 = vsub.s32 %v54, %v56
    %v58 = vrot.slane %v44, %v57
    %v59 = vcombine.high %v51, %v51
    %v60 = vcombine.high %v58, %v58
    %vm69 = vcmask 1041408
    %v70 = vsel %vm69, %v34, 0.0
    %v71 = vsel %vm69, %v42, 0.0
    %v72 = vadd.f32 %v70, %v71
    %v73 = vsel %vm69, %v41, 0.0
    %v74 = vadd.f32 %v72, %v73
    %v75 = vsel %vm69, %v43, 0.0
    %v76 = vadd.f32 %v74, %v75
    %v77 = vsel %vm69, %v51, 0.0
    %v78 = vadd.f32 %v76, %v77
    %v79 = vsel %vm69, %v59, 0.0
    %v80 = vadd.f32 %v78, %v79
    %v81 = vsel %vm69, %v58, 0.0
    %v82 = vadd.f32 %v80, %v81
    %v83 = vsel %vm69, %v60, 0.0
    %v84 = vadd.f32 %v82, %v83
    %85 = vadd.xlane.f32.xlu0 %v84
    %v86 = vpop.xlane.xlu0 %85
    %v87 = vmax.f32 %v86, 1e-24
    %v88 = vrsqrt.pop %v87
    %v91 = vunpack.c.l.s4 269488144
    %v92 = vunpack.c.0.s8 %v91
    %v93 = vlaneseq
    %v94 = vshrl.u32 %v93, 7
    %v95 = vsub.s32 %v92, %v94
    %v96 = vrot.slane %v88, %v95
    %v98 = vmul.f32 %v21, %v96
    %v99 = vmul.f32 %v22, %v96
    %100 = vst [vmem:[#allocation5] sm:$0xff] %v98
    %101 = vst [vmem:[#allocation5 + $0x8] sm:$0xff] %v99
    // Predicated region
    $region10: #{tpu_custom_call.1} parent=1 // pred_check
      _
    $region11: #{tpu_custom_call.1} parent=1 // pred_check_branch
      %103 = sbr.rel (0) target = $region13
    $region12: #{tpu_custom_call.1} parent=1 // pred_region
      %s105 = ssub.s32 256, 256
      %106 = vsyncadd [#allocation4], %s105
      %s108 = sshll.u32 [#allocation5], 4
      %s109 = int_to_ptr.vmem [resolvable:$true] %s108
      %111 = dma.vmem_to_hbm [thread:$0]  %s109, 256, %s1, [#allocation4]
    $region13: #{tpu_custom_call.1} parent=1 // pred_fallthru
      _
    // Predicated region
    $region14: #{tpu_custom_call.1} parent=1 // pred_check
      _
    $region15: #{tpu_custom_call.1} parent=1 // pred_check_branch
      %113 = sbr.rel (0) target = $region17
    $region16: #{tpu_custom_call.1} parent=1 // pred_region
      %114 = dma.done [#allocation4], 256
    $region17: #{tpu_custom_call.1} parent=1 // pred_fallthru
      _
    %115 = vsyncpa [#allocation3], 1
    %116 = vsyncpa [#allocation4], 1

</llo_original>
